<compile_context>
chip_gen: v6e
topology: v6e:2x2x1
jax: 0.10.0
libtpu: 0.0.40
codegen_flags: <defaults>
</compile_context>

<pallas_src>
import functools
import numpy as np
import jax
import jax.numpy as jnp
from jax import lax
from jax.experimental import pallas as pl
from jax.experimental.pallas import tpu as pltpu

_SUB = 8
_LANES = 128
_GROUP = _SUB * _LANES  # 1024 elements per (8,128) slab

# ---------------------------------------------------------------------------
# log Gamma(1 + targ) via Lanczos g=5 (Numerical Recipes coefficients) in
# *rational* form:
#     sqrt(2*pi) * [c0 + sum_j c_j/(targ+1+j)] / (targ+1)  ==  Num(targ)/Den(targ)
# Num (deg 6) / Den (deg 7) coefficients are computed once at import time in
# float64; in-kernel evaluation is two Horner chains (VPU) + 3 logs (EUP).
# Valid for targ >= 0 (histogram counts) up to ~3e5 (f32 range of targ**7).
# ---------------------------------------------------------------------------
_LANCZOS_C = (1.000000000190015, 76.18009172947146, -86.50532032941677,
              24.01409824083091, -1.231739572450155, 0.1208650973866179e-2,
              -0.5395239384953e-5)
_SQRT_2PI = 2.5066282746310005


def _lanczos_rational_coeffs():
    def poly_prod(ks):
        p = np.poly1d([1.0])
        for k in ks:
            p = p * np.poly1d([1.0, float(k)])
        return p

    den = poly_prod(range(1, 8))                           # (u+1)(u+2)...(u+7)
    num = _LANCZOS_C[0] * poly_prod(range(2, 8))           # c0*(u+2)...(u+7)
    for j in range(1, 7):
        num = num + _LANCZOS_C[j] * poly_prod(k for k in range(2, 8) if k != j + 1)
    num = _SQRT_2PI * num
    # poly1d coeffs are ordered highest power first (what _horner expects).
    return (tuple(float(v) for v in num.coeffs),
            tuple(float(v) for v in den.coeffs))


_LGAMMA_NUM, _LGAMMA_DEN = _lanczos_rational_coeffs()      # deg 6, deg 7


def _horner(x, coeffs):
    acc = jnp.full_like(x, coeffs[0])
    for c in coeffs[1:]:
        acc = acc * x + c
    return acc


def _lgamma1p(targ):
    """log Gamma(1 + targ) for targ >= 0 (valid up to targ ~ 3e5 in f32)."""
    num = _horner(targ, _LGAMMA_NUM)
    den = _horner(targ, _LGAMMA_DEN)
    t = targ + 6.5
    return (targ + 1.5) * jnp.log(t) - t + (jnp.log(num) - jnp.log(den))


# ---------------------------------------------------------------------------
# Kernel: elementwise Poisson-NLL terms; per-tile lane-dense (1,8,128) partial
# sum written to its own output block. The padded-tail / grid-overhang mask is
# gated to the last grid step only.
# ---------------------------------------------------------------------------
def _loss_kernel(pred_ref, targ_ref, out_ref, *, total, tb, need_mask):
    pred = pred_ref[...]            # (tb, 8, 128) f32
    targ = targ_ref[...]

    # torch.special.xlogy(targ, pred): exactly 0 wherever targ == 0.
    has_count = targ > 0.0
    safe_pred = jnp.where(has_count, pred, 1.0)
    xlogy = jnp.where(has_count, targ * jnp.log(safe_pred), 0.0)

    term = xlogy - pred - _lgamma1p(targ)

    if not need_mask:
        out_ref[...] = jnp.sum(term, axis=0, keepdims=True)
    else:
        is_last = pl.program_id(0) == pl.num_programs(0) - 1

        @pl.when(jnp.logical_not(is_last))
        def _():
            out_ref[...] = jnp.sum(term, axis=0, keepdims=True)

        @pl.when(is_last)   # only the final tile has padding / OOB overhang
        def _():
            base = (pl.num_programs(0) - 1) * (tb * _GROUP)
            within = (lax.broadcasted_iota(jnp.int32, (1, _SUB, _LANES), 1) * _LANES
                      + lax.broadcasted_iota(jnp.int32, (1, _SUB, _LANES), 2))
            slab = lax.broadcasted_iota(jnp.int32, (tb, _SUB, _LANES), 0) * _GROUP
            gidx = base + slab + within                    # flat element index
            out_ref[...] = jnp.sum(jnp.where(gidx < total, term, 0.0),
                                   axis=0, keepdims=True)


def _default_block_rows():
    """Rows-of-128-lanes per grid step: ~4 MiB/input (v6e/v7x), ~2 MiB (v5e)."""
    try:
        kind = jax.devices()[0].device_kind.lower()
    except Exception:
        kind = ""
    if "v5 lite" in kind or "v5e" in kind or "v5lite" in kind:
        return 4096   # 2 MiB/input tile; v5e default scoped VMEM is 16 MiB
    return 8192       # 4 MiB/input tile; 2 inputs x 2 buffers = 16 MiB


# ---------------------------------------------------------------------------
# Wrapper.
# ---------------------------------------------------------------------------
def pallas_poisson_loss(pred, targ, norm_until=None, block_rows=None,
                        min_pallas_elems=1 << 16):
    assert pred.shape == targ.shape
    orig_shape = pred.shape
    total = int(np.prod(orig_shape)) if orig_shape else 1
    assert total < 2**31 - 2 * _GROUP, "int32 flat-index mask would overflow"

    norm = float(np.prod(orig_shape[:norm_until])) if norm_until is not None else None

    # Tiny inputs (e.g. the production (2,8,16) histogram): pallas_call launch
    # plus wrapper reshape HLOs dominate by orders of magnitude -> evaluate the
    # handful of elements directly in XLA.
    if total < min_pallas_elems:
        loss = -jnp.sum(jax.scipy.special.xlogy(targ, pred) - pred
                        - jax.scipy.special.gammaln(1.0 + targ))
        return loss / norm if norm is not None else loss

    pred_f = jnp.ravel(pred).astype(jnp.float32)   # no-op reshape/cast if already flat f32
    targ_f = jnp.ravel(targ).astype(jnp.float32)

    rem = total % _GROUP
    if rem:
        # Minimal pad (< one slab) only when the (g,8,128) reshape is impossible.
        # TODO(synk): jnp.pad is still a full extra HBM pass; avoid by emitting
        # slab-aligned buffers upstream / fusing the loss epilogue.
        pad = _GROUP - rem
        pred_f = jnp.pad(pred_f, (0, pad))
        targ_f = jnp.pad(targ_f, (0, pad))
    g0 = (total + _GROUP - 1) // _GROUP
    pred_p = pred_f.reshape(g0, _SUB, _LANES)
    targ_p = targ_f.reshape(g0, _SUB, _LANES)

    if block_rows is None:
        block_rows = _default_block_rows()
    tb = max(1, min(block_rows // _SUB, g0))
    grid = (g0 + tb - 1) // tb
    if grid == 1 and g0 >= 2:
        # Keep >=2 independent "parallel" tiles so both v7x TensorCores get work.
        tb = (g0 + 1) // 2
        grid = (g0 + tb - 1) // tb

    # Mask needed iff the last tile touches padded elements or overhangs the
    # array (Pallas pads out-of-bounds reads with unspecified values).
    need_mask = (grid * tb * _GROUP) != total

    kernel = functools.partial(_loss_kernel, total=total, tb=tb, need_mask=need_mask)
    tile_spec = pl.BlockSpec((tb, _SUB, _LANES), lambda i: (i, 0, 0))

    cost = pl.CostEstimate(
        flops=40 * grid * tb * _GROUP,          # ~2 Horner chains + elementwise
        transcendentals=4 * grid * tb * _GROUP,  # 3 logs (lgamma) + 1 log (xlogy)
        bytes_accessed=2 * g0 * _GROUP * 4 + grid * _GROUP * 4,
    )

    partials = pl.pallas_call(
        kernel,
        out_shape=jax.ShapeDtypeStruct((grid, _SUB, _LANES), jnp.float32),
        grid_spec=pltpu.PrefetchScalarGridSpec(
            num_scalar_prefetch=0,
            grid=(grid,),
            in_specs=[tile_spec, tile_spec],
            out_specs=pl.BlockSpec((1, _SUB, _LANES), lambda i: (i, 0, 0)),
        ),
        compiler_params=pltpu.CompilerParams(
            dimension_semantics=("parallel",),        # independent tiles -> megacore
            vmem_limit_bytes=32 * 1024 * 1024),       # safe on v5e/v6e/v7x
        cost_estimate=cost,
    )(pred_p, targ_p)

    loss = -jnp.sum(partials)                         # tiny final reduce + negation
    return loss / norm if norm is not None else loss


# Plain-JAX reference of the PyTorch forward (for sanity checking only).
def _loss_ref(pred, targ, norm_until=None):
    x = -jnp.sum(jax.scipy.special.xlogy(targ, pred)
                 - pred
                 - jax.scipy.special.gammaln(1.0 + targ))
    if norm_until is not None:
        x = x / float(np.prod(pred.shape[:norm_until]))
    return x


if __name__ == "__main__":
    key = jax.random.PRNGKey(0)
    k1, k2, k3, k4, k5, k6 = jax.random.split(key, 6)

    # 1) Production-like histogram shape (tiny) -> fast XLA bypass path.
    shape = (2, 8, 16)
    pred = jax.random.uniform(k1, shape, jnp.float32, minval=0.5, maxval=10.0)
    targ = jax.random.poisson(k2, 5.0, shape).astype(jnp.float32)
    loss = jax.block_until_ready(pallas_poisson_loss(pred, targ))
    ref = jax.block_until_ready(_loss_ref(pred, targ))
    if not np.allclose(np.asarray(loss), np.asarray(ref), rtol=2e-3, atol=1e-2):
        raise AssertionError(f"mismatch (tiny/bypass): {float(loss)} vs {float(ref)}")

    # 2) Ragged shape forced through the Pallas path with a small tile:
    #    grid > 1, minimal pad, overhanging last block, masked epilogue tile.
    shape2 = (4, 33, 100)
    pred2 = jax.random.uniform(k3, shape2, jnp.float32, minval=0.5, maxval=10.0)
    targ2 = jax.random.poisson(k4, 5.0, shape2).astype(jnp.float32)
    loss2 = jax.block_until_ready(
        pallas_poisson_loss(pred2, targ2, norm_until=1, block_rows=32,
                            min_pallas_elems=0))
    ref2 = jax.block_until_ready(_loss_ref(pred2, targ2, norm_until=1))
    if not np.allclose(np.asarray(loss2), np.asarray(ref2), rtol=2e-3, atol=1e-2):
        raise AssertionError(f"mismatch (ragged/pallas): {float(loss2)} vs {float(ref2)}")

    # 3) Slab-aligned shape: no pad, no mask, grid split across two tiles.
    shape3 = (16, 8, 128)
    pred3 = jax.random.uniform(k5, shape3, jnp.float32, minval=0.5, maxval=10.0)
    targ3 = jax.random.poisson(k6, 5.0, shape3).astype(jnp.float32)
    loss3 = jax.block_until_ready(pallas_poisson_loss(pred3, targ3, min_pallas_elems=0))
    ref3 = jax.block_until_ready(_loss_ref(pred3, targ3))
    if not np.allclose(np.asarray(loss3), np.asarray(ref3), rtol=2e-3, atol=1e-2):
        raise AssertionError(f"mismatch (aligned/pallas): {float(loss3)} vs {float(ref3)}")

    print("KERNEL_OK")
</pallas_src>

<mosaic_0001>
module attributes {stable_mosaic.version = 11 : i64} {
  func.func @_loss_kernel(%arg0: i32, %arg1: memref<4x8x128xf32, #tpu.memory_space<vmem>>, %arg2: memref<4x8x128xf32, #tpu.memory_space<vmem>>, %arg3: memref<1x8x128xf32, #tpu.memory_space<vmem>>) attributes {dimension_semantics = [#tpu.dimension_semantics<parallel>], iteration_bounds = array<i64: 4>, scalar_prefetch = 0 : i64, scratch_operands = 0 : i64, tpu.core_type = #tpu.core_type<tc>, window_params = [{transform_indices = @transform_0, window_bounds = array<i64: 4, 8, 128>}, {transform_indices = @transform_1, window_bounds = array<i64: 4, 8, 128>}, {transform_indices = @transform_2, window_bounds = array<i64: 1, 8, 128>}]} {
    %c0 = arith.constant 0 : index
    %c0_0 = arith.constant 0 : index
    %c0_1 = arith.constant 0 : index
    %0 = vector.load %arg1[%c0, %c0_0, %c0_1] : memref<4x8x128xf32, #tpu.memory_space<vmem>>, vector<4x8x128xf32>
    %c0_2 = arith.constant 0 : index
    %c0_3 = arith.constant 0 : index
    %c0_4 = arith.constant 0 : index
    %1 = vector.load %arg2[%c0_2, %c0_3, %c0_4] : memref<4x8x128xf32, #tpu.memory_space<vmem>>, vector<4x8x128xf32>
    %cst = arith.constant 0.000000e+00 : f32
    %2 = vector.broadcast %cst : f32 to vector<4x8x128xf32>
    %3 = arith.cmpf ogt, %1, %2 : vector<4x8x128xf32>
    %cst_5 = arith.constant 1.000000e+00 : f32
    %4 = vector.broadcast %cst_5 : f32 to vector<4x8x128xf32>
    %5 = arith.select %3, %0, %4 : vector<4x8x128xi1>, vector<4x8x128xf32>
    %6 = math.log %5 : vector<4x8x128xf32>
    %7 = arith.mulf %1, %6 : vector<4x8x128xf32>
    %cst_6 = arith.constant 0.000000e+00 : f32
    %8 = vector.broadcast %cst_6 : f32 to vector<4x8x128xf32>
    %9 = arith.select %3, %7, %8 : vector<4x8x128xi1>, vector<4x8x128xf32>
    %10 = arith.subf %9, %0 : vector<4x8x128xf32>
    %cst_7 = arith.constant 2.50662827 : f32
    %11 = vector.broadcast %cst_7 : f32 to vector<4x8x128xf32>
    %12 = arith.mulf %11, %1 : vector<4x8x128xf32>
    %cst_8 = arith.constant 98.9073715 : f32
    %13 = vector.broadcast %cst_8 : f32 to vector<4x8x128xf32>
    %14 = arith.addf %12, %13 : vector<4x8x128xf32>
    %15 = arith.mulf %14, %1 : vector<4x8x128xf32>
    %cst_9 = arith.constant 1625.86389 : f32
    %16 = vector.broadcast %cst_9 : f32 to vector<4x8x128xf32>
    %17 = arith.addf %15, %16 : vector<4x8x128xf32>
    %18 = arith.mulf %17, %1 : vector<4x8x128xf32>
    %cst_10 = arith.constant 14251.7598 : f32
    %19 = vector.broadcast %cst_10 : f32 to vector<4x8x128xf32>
    %20 = arith.addf %18, %19 : vector<4x8x128xf32>
    %21 = arith.mulf %20, %1 : vector<4x8x128xf32>
    %cst_11 = arith.constant 70259.8671 : f32
    %22 = vector.broadcast %cst_11 : f32 to vector<4x8x128xf32>
    %23 = arith.addf %21, %22 : vector<4x8x128xf32>
    %24 = arith.mulf %23, %1 : vector<4x8x128xf32>
    %cst_12 = arith.constant 184705.031 : f32
    %25 = vector.broadcast %cst_12 : f32 to vector<4x8x128xf32>
    %26 = arith.addf %24, %25 : vector<4x8x128xf32>
    %27 = arith.mulf %26, %1 : vector<4x8x128xf32>
    %cst_13 = arith.constant 202290.109 : f32
    %28 = vector.broadcast %cst_13 : f32 to vector<4x8x128xf32>
    %29 = arith.addf %27, %28 : vector<4x8x128xf32>
    %cst_14 = arith.constant 1.000000e+00 : f32
    %30 = vector.broadcast %cst_14 : f32 to vector<4x8x128xf32>
    %31 = arith.mulf %30, %1 : vector<4x8x128xf32>
    %cst_15 = arith.constant 2.800000e+01 : f32
    %32 = vector.broadcast %cst_15 : f32 to vector<4x8x128xf32>
    %33 = arith.addf %31, %32 : vector<4x8x128xf32>
    %34 = arith.mulf %33, %1 : vector<4x8x128xf32>
    %cst_16 = arith.constant 3.220000e+02 : f32
    %35 = vector.broadcast %cst_16 : f32 to vector<4x8x128xf32>
    %36 = arith.addf %34, %35 : vector<4x8x128xf32>
    %37 = arith.mulf %36, %1 : vector<4x8x128xf32>
    %cst_17 = arith.constant 1.960000e+03 : f32
    %38 = vector.broadcast %cst_17 : f32 to vector<4x8x128xf32>
    %39 = arith.addf %37, %38 : vector<4x8x128xf32>
    %40 = arith.mulf %39, %1 : vector<4x8x128xf32>
    %cst_18 = arith.constant 6.769000e+03 : f32
    %41 = vector.broadcast %cst_18 : f32 to vector<4x8x128xf32>
    %42 = arith.addf %40, %41 : vector<4x8x128xf32>
    %43 = arith.mulf %42, %1 : vector<4x8x128xf32>
    %cst_19 = arith.constant 1.313200e+04 : f32
    %44 = vector.broadcast %cst_19 : f32 to vector<4x8x128xf32>
    %45 = arith.addf %43, %44 : vector<4x8x128xf32>
    %46 = arith.mulf %45, %1 : vector<4x8x128xf32>
    %cst_20 = arith.constant 1.306800e+04 : f32
    %47 = vector.broadcast %cst_20 : f32 to vector<4x8x128xf32>
    %48 = arith.addf %46, %47 : vector<4x8x128xf32>
    %49 = arith.mulf %48, %1 : vector<4x8x128xf32>
    %cst_21 = arith.constant 5.040000e+03 : f32
    %50 = vector.broadcast %cst_21 : f32 to vector<4x8x128xf32>
    %51 = arith.addf %49, %50 : vector<4x8x128xf32>
    %cst_22 = arith.constant 6.500000e+00 : f32
    %52 = vector.broadcast %cst_22 : f32 to vector<4x8x128xf32>
    %53 = arith.addf %1, %52 : vector<4x8x128xf32>
    %cst_23 = arith.constant 1.500000e+00 : f32
    %54 = vector.broadcast %cst_23 : f32 to vector<4x8x128xf32>
    %55 = arith.addf %1, %54 : vector<4x8x128xf32>
    %56 = math.log %53 : vector<4x8x128xf32>
    %57 = arith.mulf %55, %56 : vector<4x8x128xf32>
    %58 = arith.subf %57, %53 : vector<4x8x128xf32>
    %59 = math.log %29 : vector<4x8x128xf32>
    %60 = math.log %51 : vector<4x8x128xf32>
    %61 = arith.subf %59, %60 : vector<4x8x128xf32>
    %62 = arith.addf %58, %61 : vector<4x8x128xf32>
    %63 = arith.subf %10, %62 : vector<4x8x128xf32>
    %c3_i32 = arith.constant 3 : i32
    %64 = arith.cmpi eq, %arg0, %c3_i32 : i32
    %true = arith.constant true
    %65 = arith.xori %64, %true : i1
    %66 = arith.extui %65 : i1 to i32
    %c0_i32 = arith.constant 0 : i32
    %67 = arith.cmpi ne, %66, %c0_i32 : i32
    scf.if %67 {
      %cst_25 = arith.constant dense<0.000000e+00> : vector<8x128xf32>
      %70 = vector.multi_reduction <add>, %63, %cst_25 [0] : vector<4x8x128xf32> to vector<8x128xf32>
      %71 = vector.shape_cast %70 : vector<8x128xf32> to vector<1x8x128xf32>
      %c0_26 = arith.constant 0 : index
      %c0_27 = arith.constant 0 : index
      %c0_28 = arith.constant 0 : index
      %72 = vector.load %arg3[%c0_26, %c0_27, %c0_28] : memref<1x8x128xf32, #tpu.memory_space<vmem>>, vector<1x8x128xf32>
      tpu.vector_store %arg3[%c0_26, %c0_27, %c0_28], %71 {strides = array<i32>} : memref<1x8x128xf32, #tpu.memory_space<vmem>>, vector<1x8x128xf32>,
    } else {
    }
    %68 = arith.extui %64 : i1 to i32
    %c0_i32_24 = arith.constant 0 : i32
    %69 = arith.cmpi ne, %68, %c0_i32_24 : i32
    scf.if %69 {
      %70 = tpu.iota {dimensions = array<i32: 1>} : vector<1x8x128xi32>
      %c128_i32 = arith.constant 128 : i32
      %71 = vector.broadcast %c128_i32 : i32 to vector<1x8x128xi32>
      %72 = arith.muli %70, %71 : vector<1x8x128xi32>
      %73 = tpu.iota {dimensions = array<i32: 2>} : vector<1x8x128xi32>
      %74 = arith.addi %72, %73 : vector<1x8x128xi32>
      %75 = tpu.iota {dimensions = array<i32: 0>} : vector<4x8x128xi32>
      %c1024_i32 = arith.constant 1024 : i32
      %76 = vector.broadcast %c1024_i32 : i32 to vector<4x8x128xi32>
      %77 = arith.muli %75, %76 : vector<4x8x128xi32>
      %c12288_i32 = arith.constant 12288 : i32
      %78 = vector.broadcast %c12288_i32 : i32 to vector<4x8x128xi32>
      %79 = arith.addi %78, %77 : vector<4x8x128xi32>
      %80 = vector.broadcast %74 : vector<1x8x128xi32> to vector<4x8x128xi32>
      %81 = arith.addi %79, %80 : vector<4x8x128xi32>
      %c13200_i32 = arith.constant 13200 : i32
      %82 = vector.broadcast %c13200_i32 : i32 to vector<4x8x128xi32>
      %83 = arith.cmpi slt, %81, %82 : vector<4x8x128xi32>
      %cst_25 = arith.constant 0.000000e+00 : f32
      %84 = vector.broadcast %cst_25 : f32 to vector<4x8x128xf32>
      %85 = arith.select %83, %63, %84 : vector<4x8x128xi1>, vector<4x8x128xf32>
      %cst_26 = arith.constant dense<0.000000e+00> : vector<8x128xf32>
      %86 = vector.multi_reduction <add>, %85, %cst_26 [0] : vector<4x8x128xf32> to vector<8x128xf32>
      %87 = vector.shape_cast %86 : vector<8x128xf32> to vector<1x8x128xf32>
      %c0_27 = arith.constant 0 : index
      %c0_28 = arith.constant 0 : index
      %c0_29 = arith.constant 0 : index
      %88 = vector.load %arg3[%c0_27, %c0_28, %c0_29] : memref<1x8x128xf32, #tpu.memory_space<vmem>>, vector<1x8x128xf32>
      tpu.vector_store %arg3[%c0_27, %c0_28, %c0_29], %87 {strides = array<i32>} : memref<1x8x128xf32, #tpu.memory_space<vmem>>, vector<1x8x128xf32>,
    } else {
    }
    return
  }
  func.func @transform_0(%arg0: i32) -> (i32, i32, i32) {
    %c0_i32 = arith.constant 0 : i32
    %c0_i32_0 = arith.constant 0 : i32
    %c0_i32_1 = arith.constant 0 : i32
    return %arg0, %c0_i32, %c0_i32_0 : i32, i32, i32
  }
  func.func @transform_1(%arg0: i32) -> (i32, i32, i32) {
    %c0_i32 = arith.constant 0 : i32
    %c0_i32_0 = arith.constant 0 : i32
    %c0_i32_1 = arith.constant 0 : i32
    return %arg0, %c0_i32, %c0_i32_0 : i32, i32, i32
  }
  func.func @transform_2(%arg0: i32) -> (i32, i32, i32) {
    %c0_i32 = arith.constant 0 : i32
    %c0_i32_0 = arith.constant 0 : i32
    %c0_i32_1 = arith.constant 0 : i32
    return %arg0, %c0_i32, %c0_i32_0 : i32, i32, i32
  }
}

</mosaic_0001>

<llo_original>
// kernel: tpu_custom_call.1
$region0: #{tpu_custom_call.1}
  #allocation0 [shape = 'u32[]', space=smem, size = 0x4, offset = 0x4, fixed_abs, tag = 'smem constant byte address 0x4 - core index']
  #allocation1 [shape = 'u32[144,128]{1,0:T(1,128)}', space=vmem, size = 0x12000, scoped, tag = 'internal scratch']
  %s0 = inlined_call_operand.hbm [shape: f32[13,8,128], index: 0, kind: input, shape index: {}]
  %s1 = inlined_call_operand.hbm [shape: f32[13,8,128], index: 1, kind: input, shape index: {}]
  %s2 = inlined_call_operand.hbm [shape: f32[4,8,128], index: 2, kind: output, shape index: {}]
  %s3 = sld [smem:[#allocation0]]
  $region57: #{tpu_custom_call.1} parent=0
    _
  %s5 = ssub.s32 1, %s3
  %s6 = scalar_select 0, %s5, %s3
  $region1: #{tpu_custom_call.1} parent=0
    #allocation2 [shape = 'u8[32768]{0}', space=vmem, size = 0x8000, scoped, tag = 'input window, operand 0']
    #allocation3 [shape = 's32[2]{0}', space=sflag, size = 0x8, scoped, tag = 'scoped memory for tpu_custom_call.1']
    #allocation4 [shape = 's32[2]{0}', space=sflag, size = 0x8, scoped, tag = 'scoped memory for tpu_custom_call.1']
    #allocation5 [shape = 'u8[32768]{0}', space=vmem, size = 0x8000, scoped, tag = 'input window, operand 1']
    #allocation6 [shape = 's32[2]{0}', space=sflag, size = 0x8, scoped, tag = 'scoped memory for tpu_custom_call.1']
    #allocation7 [shape = 'u8[8192]{0}', space=vmem, size = 0x2000, scoped, tag = 'output window, operand 0']
    %7 = vsyncpa [#allocation3], 0
    %s8 = scalar_lea.sflag [#allocation3], 1
    %9 = vsyncpa %s8, 0
    %10 = vsyncpa [#allocation6], 0
    %s11 = scalar_lea.sflag [#allocation6], 1
    %12 = vsyncpa %s11, 0
    %13 = vsyncpa [#allocation4], 0
    %s14 = scalar_lea.sflag [#allocation4], 1
    %15 = vsyncpa %s14, 0
    loop: start=0, step=1, limit=6
    $region2: #{tpu_custom_call.1} parent=1 // loop_pre_header
      _
    $region3: #{tpu_custom_call.1} parent=1 // loop_header
      %s17 = sphi 0, %s21
      %p18 = scmp.ge.s32.totalorder %s17, 6
      %s27 = sphi 0, %s29
      %s30 = sphi 0, %s27
      %s31 = sphi 0, %s30
      %s47 = sphi 0, %s31
      %s53 = sphi 0, %s55
      %s56 = sphi 0, %s53
      %s57 = sphi 0, %s56
      %s73 = sphi 0, %s57
      %s79 = sphi 0, %s81
      %s82 = sphi 0, %s79
      %s83 = sphi 0, %s82
      %s99 = sphi 0, %s83
    $region4: #{tpu_custom_call.1} parent=1 // loop_header_branch
      %20 = sbr.rel (%p18) target = $region8
    $region5: #{tpu_custom_call.1} parent=1 // loop_body
      %s22 = ssub.s32 %s17, 1
      %s23 = ssub.s32 %s17, 2
      %s24 = sadd.s32 %s17, 1
      %s25 = ssub.s32 %s17, %s24
      %p26 = scmp.eq.s32.totalorder %s25, 0
      %s28 = sadd.s32 %s27, 1
      %s29 = scalar_select %p26, %s27, %s28
      %p32 = pneg %p26
      %p33 = scmp.eq.s32.totalorder %s17, 3
      %p34 = por %p32, %p33
      %p35 = scmp.ne.s32.totalorder %s27, %s30
      %p36 = scmp.eq.s32.totalorder %s17, 0
      %p37 = por %p35, %p36
      %p38 = scmp.ne.s32.totalorder %s27, %s30
      %p39 = scmp.eq.s32.totalorder %s22, 3
      %p40 = por %p38, %p39
      %p41 = scmp.ne.s32.totalorder %s30, %s31
      %p42 = scmp.eq.s32.totalorder %s22, 0
      %p43 = por %p41, %p42
      %p44 = scmp.ne.s32.totalorder %s30, %s31
      %p45 = scmp.eq.s32.totalorder %s23, 3
      %p46 = por %p44, %p45
      %p48 = scmp.ne.s32.totalorder %s31, %s47
      %p49 = scmp.eq.s32.totalorder %s23, 0
      %p50 = por %p48, %p49
      %s51 = ssub.s32 %s17, %s24
      %p52 = scmp.eq.s32.totalorder %s51, 0
      %s54 = sadd.s32 %s53, 1
      %s55 = scalar_select %p52, %s53, %s54
      %p58 = pneg %p52
      %p59 = scmp.eq.s32.totalorder %s17, 3
      %p60 = por %p58, %p59
      %p61 = scmp.ne.s32.totalorder %s53, %s56
      %p62 = scmp.eq.s32.totalorder %s17, 0
      %p63 = por %p61, %p62
      %p64 = scmp.ne.s32.totalorder %s53, %s56
      %p65 = scmp.eq.s32.totalorder %s22, 3
      %p66 = por %p64, %p65
      %p67 = scmp.ne.s32.totalorder %s56, %s57
      %p68 = scmp.eq.s32.totalorder %s22, 0
      %p69 = por %p67, %p68
      %p70 = scmp.ne.s32.totalorder %s56, %s57
      %p71 = scmp.eq.s32.totalorder %s23, 3
      %p72 = por %p70, %p71
      %p74 = scmp.ne.s32.totalorder %s57, %s73
      %p75 = scmp.eq.s32.totalorder %s23, 0
      %p76 = por %p74, %p75
      %s77 = ssub.s32 %s17, %s24
      %p78 = scmp.eq.s32.totalorder %s77, 0
      %s80 = sadd.s32 %s79, 1
      %s81 = scalar_select %p78, %s79, %s80
      %p84 = pneg %p78
      %p85 = scmp.eq.s32.totalorder %s17, 3
      %p86 = por %p84, %p85
      %p87 = scmp.ne.s32.totalorder %s79, %s82
      %p88 = scmp.eq.s32.totalorder %s17, 0
      %p89 = por %p87, %p88
      %p90 = scmp.ne.s32.totalorder %s79, %s82
      %p91 = scmp.eq.s32.totalorder %s22, 3
      %p92 = por %p90, %p91
      %p93 = scmp.ne.s32.totalorder %s82, %s83
      %p94 = scmp.eq.s32.totalorder %s22, 0
      %p95 = por %p93, %p94
      %p96 = scmp.ne.s32.totalorder %s82, %s83
      %p97 = scmp.eq.s32.totalorder %s23, 3
      %p98 = por %p96, %p97
      %p100 = scmp.ne.s32.totalorder %s83, %s99
      %p101 = scmp.eq.s32.totalorder %s23, 0
      %p102 = por %p100, %p101
      %p103 = scmp.le.s32.totalorder 1, %s17
      %p104 = scmp.lt.s32.totalorder %s17, 5
      %p105 = pnand %p103, %p104
      %p106 = pneg %p105
      // Predicated region
      $region9: #{tpu_custom_call.1} parent=5 // pred_check
        _
      $region10: #{tpu_custom_call.1} parent=5 // pred_check_branch
        %108 = sbr.rel (%p105) target = $region12
      $region11: #{tpu_custom_call.1} parent=5 // pred_region
        %s109 = ssub.s32 %s17, 1
      $region12: #{tpu_custom_call.1} parent=5 // pred_fallthru
        _
      %p110 = scmp.lt.s32.totalorder %s17, 4
      // Predicated region
      $region13: #{tpu_custom_call.1} parent=5 // pred_check
        %p111 = pneg %p110
      $region14: #{tpu_custom_call.1} parent=5 // pred_check_branch
        %113 = sbr.rel (%p111) target = $region16
      $region15: #{tpu_custom_call.1} parent=5 // pred_region
        // Predicated region
        $region17: #{tpu_custom_call.1} parent=15 // pred_check
          %p114 = pneg %p37
        $region18: #{tpu_custom_call.1} parent=15 // pred_check_branch
          %116 = sbr.rel (%p114) target = $region20
        $region19: #{tpu_custom_call.1} parent=15 // pred_region
          %s117 = sand.u32 %s27, 1
          %s118 = scalar_lea.sflag [#allocation3], %s117
          %s119 = sand.u32 %s27, 1
          %s120 = smul.addr %s119, 32
          %s121 = scalar_lea.vmem [#allocation2], %s120
          %s122 = smul.u32 4, %s17
          %s123 = ssub.s32 13, %s122
          %p124 = scmp.lt.s32.totalorder %s123, 4
          %s125 = scalar_select %p124, %s123, 4
          %s126 = smul.u32 128, %s125
          %s128 = ssub.s32 512, %s126
          %129 = vsyncadd %s118, %s128
          %p130 = scmp.ne.s32.totalorder 0, %s126
          %s131 = smul.addr %s122, 128
          %s132 = scalar_lea.hbm %s0, %s131
          %s133 = smul.u32 8, %s125
          %s134 = sshll.u32 %s121, 4
          %s135 = int_to_ptr.vmem [resolvable:$true] %s134
          %s136 = sshll.u32 %s133, 4
          %140 = dma.hbm_to_vmem [thread:$0]  (%p130), %s132, %s136, %s135, %s118, 128, 128, 8
        $region20: #{tpu_custom_call.1} parent=15 // pred_fallthru
          _
        // Predicated region
        $region21: #{tpu_custom_call.1} parent=15 // pred_check
          %p141 = pneg %p63
        $region22: #{tpu_custom_call.1} parent=15 // pred_check_branch
          %143 = sbr.rel (%p141) target = $region24
        $region23: #{tpu_custom_call.1} parent=15 // pred_region
          %s144 = sand.u32 %s53, 1
          %s145 = scalar_lea.sflag [#allocation6], %s144
          %s146 = sand.u32 %s53, 1
          %s147 = smul.addr %s146, 32
          %s148 = scalar_lea.vmem [#allocation5], %s147
          %s149 = smul.u32 4, %s17
          %s150 = ssub.s32 13, %s149
          %p151 = scmp.lt.s32.totalorder %s150, 4
          %s152 = scalar_select %p151, %s150, 4
          %s153 = smul.u32 128, %s152
          %s155 = ssub.s32 512, %s153
          %156 = vsyncadd %s145, %s155
          %p157 = scmp.ne.s32.totalorder 0, %s153
          %s158 = smul.addr %s149, 128
          %s159 = scalar_lea.hbm %s1, %s158
          %s160 = smul.u32 8, %s152
          %s161 = sshll.u32 %s148, 4
          %s162 = int_to_ptr.vmem [resolvable:$true] %s161
          %s163 = sshll.u32 %s160, 4
          %167 = dma.hbm_to_vmem [thread:$0]  (%p157), %s159, %s163, %s162, %s145, 128, 128, 8
        $region24: #{tpu_custom_call.1} parent=15 // pred_fallthru
          _
      $region16: #{tpu_custom_call.1} parent=5 // pred_fallthru
        _
      %p168 = scmp.le.s32.totalorder 1, %s17
      %p169 = scmp.lt.s32.totalorder %s17, 5
      %p170 = pnand %p168, %p169
      %p171 = pneg %p170
      // Predicated region
      $region25: #{tpu_custom_call.1} parent=5 // pred_check
        _
      $region26: #{tpu_custom_call.1} parent=5 // pred_check_branch
        %173 = sbr.rel (%p170) target = $region28
      $region27: #{tpu_custom_call.1} parent=5 // pred_region
        %s174 = ssub.s32 %s17, 1
        %s175 = sand.u32 %s30, 1
        %s176 = scalar_lea.sflag [#allocation3], %s175
        %s177 = sand.u32 %s30, 1
        %s178 = smul.addr %s177, 32
        %s179 = scalar_lea.vmem [#allocation2], %s178
        // Predicated region
        $region29: #{tpu_custom_call.1} parent=27 // pred_check
          %p180 = pneg %p43
        $region30: #{tpu_custom_call.1} parent=27 // pred_check_branch
          %182 = sbr.rel (%p180) target = $region32
        $region31: #{tpu_custom_call.1} parent=27 // pred_region
          %183 = dma.done %s176, 512
        $region32: #{tpu_custom_call.1} parent=27 // pred_fallthru
          _
        %s184 = sand.u32 %s56, 1
        %s185 = scalar_lea.sflag [#allocation6], %s184
        %s186 = sand.u32 %s56, 1
        %s187 = smul.addr %s186, 32
        %s188 = scalar_lea.vmem [#allocation5], %s187
        // Predicated region
        $region33: #{tpu_custom_call.1} parent=27 // pred_check
          %p189 = pneg %p69
        $region34: #{tpu_custom_call.1} parent=27 // pred_check_branch
          %191 = sbr.rel (%p189) target = $region36
        $region35: #{tpu_custom_call.1} parent=27 // pred_region
          %192 = dma.done %s185, 512
        $region36: #{tpu_custom_call.1} parent=27 // pred_fallthru
          _
        %s193 = sand.u32 %s30, 1
        %s194 = scalar_lea.sflag [#allocation3], %s193
        %s195 = sand.u32 %s30, 1
        %s196 = smul.addr %s195, 32
        %s197 = scalar_lea.vmem [#allocation2], %s196
        %p198 = pneg %p43
        %p199 = pneg %p40
        %s200 = sand.u32 %s56, 1
        %s201 = scalar_lea.sflag [#allocation6], %s200
        %s202 = sand.u32 %s56, 1
        %s203 = smul.addr %s202, 32
        %s204 = scalar_lea.vmem [#allocation5], %s203
        %p205 = pneg %p69
        %p206 = pneg %p66
        %p207 = pneg %p95
        %p208 = pneg %p92
        %s209 = sand.u32 %s82, 1
        %s210 = scalar_lea.sflag [#allocation4], %s209
        %s211 = sand.u32 %s82, 1
        %s212 = smul.addr %s211, 8
        %s213 = scalar_lea.vmem [#allocation7], %s212
        %s214 = smul.u32 4, %s22
        %s215 = ssub.s32 13, %s214
        %p216 = scmp.lt.s32.totalorder %s215, 4
        %s217 = scalar_select %p216, %s215, 4
        %s218 = smul.u32 128, %s217
        %s219 = smul.u32 4, %s22
        %s220 = ssub.s32 13, %s219
        %p221 = scmp.lt.s32.totalorder %s220, 4
        %s222 = scalar_select %p221, %s220, 4
        %s223 = smul.u32 128, %s222
        %v224 = vld [vmem:[%s179] sm:$0xff]
        %v225 = vld [vmem:[%s179 + $0x8] sm:$0xff]
        %v226 = vld [vmem:[%s179 + $0x10] sm:$0xff]
        %v227 = vld [vmem:[%s179 + $0x18] sm:$0xff]
        %v228 = vld [vmem:[%s188] sm:$0xff]
        %v229 = vld [vmem:[%s188 + $0x8] sm:$0xff]
        %v230 = vld [vmem:[%s188 + $0x10] sm:$0xff]
        %v231 = vld [vmem:[%s188 + $0x18] sm:$0xff]
        %vm232 = vcmp.gt.f32.partialorder %v228, 0.0
        %vm233 = vcmp.gt.f32.partialorder %v229, 0.0
        %vm234 = vcmp.gt.f32.partialorder %v230, 0.0
        %vm235 = vcmp.gt.f32.partialorder %v231, 0.0
        %v236 = vsel %vm232, %v224, 1.0
        %v237 = vsel %vm233, %v225, 1.0
        %v238 = vsel %vm234, %v226, 1.0
        %v239 = vsel %vm235, %v227, 1.0
        %v240 = vlog2.pop %v236
        %v241 = vmul.f32 %v240, 0.6931472
        %v242 = vlog2.pop %v237
        %v243 = vmul.f32 %v242, 0.6931472
        %v244 = vlog2.pop %v238
        %v245 = vmul.f32 %v244, 0.6931472
        %v246 = vlog2.pop %v239
        %v247 = vmul.f32 %v246, 0.6931472
        %v248 = vmul.f32 %v228, %v241
        %v249 = vmul.f32 %v229, %v243
        %v250 = vmul.f32 %v230, %v245
        %v251 = vmul.f32 %v231, %v247
        %v252 = vsel %vm232, %v248, 0.0
        %v253 = vsel %vm233, %v249, 0.0
        %v254 = vsel %vm234, %v250, 0.0
        %v255 = vsel %vm235, %v251, 0.0
        %v256 = vsub.f32 %v252, %v224
        %v257 = vsub.f32 %v253, %v225
        %v258 = vsub.f32 %v254, %v226
        %v259 = vsub.f32 %v255, %v227
        %v260 = vmul.f32 %v228, 2.5066283
        %v261 = vmul.f32 %v229, 2.5066283
        %v262 = vmul.f32 %v230, 2.5066283
        %v263 = vmul.f32 %v231, 2.5066283
        %v264 = vadd.f32 %v260, 98.90737
        %v265 = vadd.f32 %v261, 98.90737
        %v266 = vadd.f32 %v262, 98.90737
        %v267 = vadd.f32 %v263, 98.90737
        %v268 = vmul.f32 %v264, %v228
        %v269 = vmul.f32 %v265, %v229
        %v270 = vmul.f32 %v266, %v230
        %v271 = vmul.f32 %v267, %v231
        %v272 = vadd.f32 %v268, 1625.8639
        %v273 = vadd.f32 %v269, 1625.8639
        %v274 = vadd.f32 %v270, 1625.8639
        %v275 = vadd.f32 %v271, 1625.8639
        %v276 = vmul.f32 %v272, %v228
        %v277 = vmul.f32 %v273, %v229
        %v278 = vmul.f32 %v274, %v230
        %v279 = vmul.f32 %v275, %v231
        %v280 = vadd.f32 %v276, 14251.76
        %v281 = vadd.f32 %v277, 14251.76
        %v282 = vadd.f32 %v278, 14251.76
        %v283 = vadd.f32 %v279, 14251.76
        %v284 = vmul.f32 %v280, %v228
        %v285 = vmul.f32 %v281, %v229
        %v286 = vmul.f32 %v282, %v230
        %v287 = vmul.f32 %v283, %v231
        %v288 = vadd.f32 %v284, 70259.87
        %v289 = vadd.f32 %v285, 70259.87
        %v290 = vadd.f32 %v286, 70259.87
        %v291 = vadd.f32 %v287, 70259.87
        %v292 = vmul.f32 %v288, %v228
        %v293 = vmul.f32 %v289, %v229
        %v294 = vmul.f32 %v290, %v230
        %v295 = vmul.f32 %v291, %v231
        %v296 = vadd.f32 %v292, 184705.03
        %v297 = vadd.f32 %v293, 184705.03
        %v298 = vadd.f32 %v294, 184705.03
        %v299 = vadd.f32 %v295, 184705.03
        %v300 = vmul.f32 %v296, %v228
        %v301 = vmul.f32 %v297, %v229
        %v302 = vmul.f32 %v298, %v230
        %v303 = vmul.f32 %v299, %v231
        %v304 = vadd.f32 %v300, 202290.11
        %v305 = vadd.f32 %v301, 202290.11
        %v306 = vadd.f32 %v302, 202290.11
        %v307 = vadd.f32 %v303, 202290.11
        %v308 = vadd.f32 %v228, 28.0
        %v309 = vadd.f32 %v229, 28.0
        %v310 = vadd.f32 %v230, 28.0
        %v311 = vadd.f32 %v231, 28.0
        %v312 = vmul.f32 %v308, %v228
        %v313 = vmul.f32 %v309, %v229
        %v314 = vmul.f32 %v310, %v230
        %v315 = vmul.f32 %v311, %v231
        %v316 = vadd.f32 %v312, 322.0
        %v317 = vadd.f32 %v313, 322.0
        %v318 = vadd.f32 %v314, 322.0
        %v319 = vadd.f32 %v315, 322.0
        %v320 = vmul.f32 %v316, %v228
        %v321 = vmul.f32 %v317, %v229
        %v322 = vmul.f32 %v318, %v230
        %v323 = vmul.f32 %v319, %v231
        %v324 = vadd.f32 %v320, 1960.0
        %v325 = vadd.f32 %v321, 1960.0
        %v326 = vadd.f32 %v322, 1960.0
        %v327 = vadd.f32 %v323, 1960.0
        %v328 = vmul.f32 %v324, %v228
        %v329 = vmul.f32 %v325, %v229
        %v330 = vmul.f32 %v326, %v230
        %v331 = vmul.f32 %v327, %v231
        %v332 = vadd.f32 %v328, 6769.0
        %v333 = vadd.f32 %v329, 6769.0
        %v334 = vadd.f32 %v330, 6769.0
        %v335 = vadd.f32 %v331, 6769.0
        %v336 = vmul.f32 %v332, %v228
        %v337 = vmul.f32 %v333, %v229
        %v338 = vmul.f32 %v334, %v230
        %v339 = vmul.f32 %v335, %v231
        %v340 = vadd.f32 %v336, 13132.0
        %v341 = vadd.f32 %v337, 13132.0
        %v342 = vadd.f32 %v338, 13132.0
        %v343 = vadd.f32 %v339, 13132.0
        %v344 = vmul.f32 %v340, %v228
        %v345 = vmul.f32 %v341, %v229
        %v346 = vmul.f32 %v342, %v230
        %v347 = vmul.f32 %v343, %v231
        %v348 = vadd.f32 %v344, 13068.0
        %v349 = vadd.f32 %v345, 13068.0
        %v350 = vadd.f32 %v346, 13068.0
        %v351 = vadd.f32 %v347, 13068.0
        %v352 = vmul.f32 %v348, %v228
        %v353 = vmul.f32 %v349, %v229
        %v354 = vmul.f32 %v350, %v230
        %v355 = vmul.f32 %v351, %v231
        %v356 = vadd.f32 %v352, 5040.0
        %v357 = vadd.f32 %v353, 5040.0
        %v358 = vadd.f32 %v354, 5040.0
        %v359 = vadd.f32 %v355, 5040.0
        %v360 = vadd.f32 %v228, 6.5
        %v361 = vadd.f32 %v229, 6.5
        %v362 = vadd.f32 %v230, 6.5
        %v363 = vadd.f32 %v231, 6.5
        %v364 = vadd.f32 %v228, 1.5
        %v365 = vadd.f32 %v229, 1.5
        %v366 = vadd.f32 %v230, 1.5
        %v367 = vadd.f32 %v231, 1.5
        %v368 = vlog2.pop %v360
        %v369 = vmul.f32 %v368, 0.6931472
        %v370 = vlog2.pop %v361
        %v371 = vmul.f32 %v370, 0.6931472
        %v372 = vlog2.pop %v362
        %v373 = vmul.f32 %v372, 0.6931472
        %v374 = vlog2.pop %v363
        %v375 = vmul.f32 %v374, 0.6931472
        %v376 = vmul.f32 %v364, %v369
        %v377 = vmul.f32 %v365, %v371
        %v378 = vmul.f32 %v366, %v373
        %v379 = vmul.f32 %v367, %v375
        %v380 = vsub.f32 %v376, %v360
        %v381 = vsub.f32 %v377, %v361
        %v382 = vsub.f32 %v378, %v362
        %v383 = vsub.f32 %v379, %v363
        %v384 = vlog2.pop %v304
        %v385 = vmul.f32 %v384, 0.6931472
        %v386 = vlog2.pop %v305
        %v387 = vmul.f32 %v386, 0.6931472
        %v388 = vlog2.pop %v306
        %v389 = vmul.f32 %v388, 0.6931472
        %v390 = vlog2.pop %v307
        %v391 = vmul.f32 %v390, 0.6931472
        %v392 = vlog2.pop %v356
        %v393 = vmul.f32 %v392, 0.6931472
        %v394 = vlog2.pop %v357
        %v395 = vmul.f32 %v394, 0.6931472
        %v396 = vlog2.pop %v358
        %v397 = vmul.f32 %v396, 0.6931472
        %v398 = vlog2.pop %v359
        %v399 = vmul.f32 %v398, 0.6931472
        %v400 = vsub.f32 %v385, %v393
        %v401 = vsub.f32 %v387, %v395
        %v402 = vsub.f32 %v389, %v397
        %v403 = vsub.f32 %v391, %v399
        %v404 = vadd.f32 %v380, %v400
        %v405 = vadd.f32 %v381, %v401
        %v406 = vadd.f32 %v382, %v402
        %v407 = vadd.f32 %v383, %v403
        %v408 = vsub.f32 %v256, %v404
        %v409 = vsub.f32 %v257, %v405
        %v410 = vsub.f32 %v258, %v406
        %v411 = vsub.f32 %v259, %v407
        %p412 = scmp.eq.s32.totalorder %s22, 3
        %p413 = scmp.ne.s32.totalorder %s22, 3
        // Predicated region
        $region37: #{tpu_custom_call.1} parent=27 // pred_check
          %p414 = pneg %p413
        $region38: #{tpu_custom_call.1} parent=27 // pred_check_branch
          %416 = sbr.rel (%p414) target = $region40
        $region39: #{tpu_custom_call.1} parent=27 // pred_region
          %v417 = vadd.f32 %v408, %v409
          %v418 = vadd.f32 %v417, %v410
          %v419 = vadd.f32 %v418, %v411
          %420 = vst [vmem:[%s213] sm:$0xff] %v419
        $region40: #{tpu_custom_call.1} parent=27 // pred_fallthru
          _
        // Predicated region
        $region41: #{tpu_custom_call.1} parent=27 // pred_check
          %p421 = pneg %p412
        $region42: #{tpu_custom_call.1} parent=27 // pred_check_branch
          %423 = sbr.rel (%p421) target = $region44
        $region43: #{tpu_custom_call.1} parent=27 // pred_region
          %v424 = vlaneseq
          %v425 = vshrl.u32 %v424, 7
          %v426 = vmul.u32 %v425, 128
          %v427 = vlaneseq
          %v428 = vand.u32 %v427, 127
          %v429 = vadd.s32 %v426, %v428
          %v430 = vadd.s32 %v429, 12288
          %v431 = vadd.s32 %v429, 13312
          %v432 = vadd.s32 %v429, 14336
          %v433 = vadd.s32 %v429, 15360
          %vm434 = vcmp.lt.s32.totalorder %v430, 13200
          %vm435 = vcmp.lt.s32.totalorder %v431, 13200
          %vm436 = vcmp.lt.s32.totalorder %v432, 13200
          %vm437 = vcmp.lt.s32.totalorder %v433, 13200
          %v438 = vsel %vm434, %v408, 0.0
          %v439 = vsel %vm435, %v409, 0.0
          %v440 = vsel %vm436, %v410, 0.0
          %v441 = vsel %vm437, %v411, 0.0
          %v442 = vadd.f32 %v438, %v439
          %v443 = vadd.f32 %v442, %v440
          %v444 = vadd.f32 %v443, %v441
          %445 = vst [vmem:[%s213] sm:$0xff] %v444
        $region44: #{tpu_custom_call.1} parent=27 // pred_fallthru
          _
        %s446 = sand.u32 %s82, 1
        %s447 = scalar_lea.sflag [#allocation4], %s446
        %s448 = sand.u32 %s82, 1
        %s449 = smul.addr %s448, 8
        %s450 = scalar_lea.vmem [#allocation7], %s449
        // Predicated region
        $region45: #{tpu_custom_call.1} parent=27 // pred_check
          %p451 = pneg %p92
        $region46: #{tpu_custom_call.1} parent=27 // pred_check_branch
          %453 = sbr.rel (%p451) target = $region48
        $region47: #{tpu_custom_call.1} parent=27 // pred_region
          %s455 = ssub.s32 128, 128
          %456 = vsyncadd %s447, %s455
          %s457 = smul.addr %s22, 128
          %s458 = scalar_lea.hbm %s2, %s457
          %s460 = sshll.u32 %s450, 4
          %s461 = int_to_ptr.vmem [resolvable:$true] %s460
          %463 = dma.vmem_to_hbm [thread:$0]  %s461, 128, %s458, %s447
        $region48: #{tpu_custom_call.1} parent=27 // pred_fallthru
          _
      $region28: #{tpu_custom_call.1} parent=5 // pred_fallthru
        _
      %p464 = scmp.le.s32.totalorder 2, %s17
      // Predicated region
      $region49: #{tpu_custom_call.1} parent=5 // pred_check
        %p465 = pneg %p464
      $region50: #{tpu_custom_call.1} parent=5 // pred_check_branch
        %467 = sbr.rel (%p465) target = $region52
      $region51: #{tpu_custom_call.1} parent=5 // pred_region
        %s468 = ssub.s32 %s17, 2
        // Predicated region
        $region53: #{tpu_custom_call.1} parent=51 // pred_check
          %p469 = pneg %p98
        $region54: #{tpu_custom_call.1} parent=51 // pred_check_branch
          %471 = sbr.rel (%p469) target = $region56
        $region55: #{tpu_custom_call.1} parent=51 // pred_region
          %s472 = sand.u32 %s83, 1
          %s473 = scalar_lea.sflag [#allocation4], %s472
          %s474 = sand.u32 %s83, 1
          %s475 = smul.addr %s474, 8
          %s476 = scalar_lea.vmem [#allocation7], %s475
          %477 = dma.done %s473, 128
        $region56: #{tpu_custom_call.1} parent=51 // pred_fallthru
          _
      $region52: #{tpu_custom_call.1} parent=5 // pred_fallthru
        _
    $region6: #{tpu_custom_call.1} parent=1 // loop_footer
      %s21 = sadd.s32 1, %s17
    $region7: #{tpu_custom_call.1} parent=1 // loop_footer_branch
      %16 = sbr.rel target = $region3
    $region8: #{tpu_custom_call.1} parent=1 // loop_exit
      _
    %478 = vsyncpa [#allocation3], 1
    %s479 = scalar_lea.sflag [#allocation3], 1
    %480 = vsyncpa %s479, 1
    %481 = vsyncpa [#allocation6], 1
    %s482 = scalar_lea.sflag [#allocation6], 1
    %483 = vsyncpa %s482, 1
    %484 = vsyncpa [#allocation4], 1
    %s485 = scalar_lea.sflag [#allocation4], 1
    %486 = vsyncpa %s485, 1

</llo_original>
